<compile_context>
chip_gen: v7x
topology: tpu7x:2x2x1
jax: 0.10.0
libtpu: 0.0.40
codegen_flags: <defaults>
</compile_context>

<pallas_src>
import jax
import jax.numpy as jnp
from jax.experimental import pallas as pl
from jax.experimental.pallas import tpu as pltpu


def _broadcast_prompt_kernel(pool_ref, out_ref):
    # pool_ref: (1, pool_size*d_model)  lane-dense prompt pool, VMEM-resident
    #           (constant block index -> single HBM read for the whole grid).
    # out_ref : (bt, pool_size*d_model) lane-dense output tile for this batch
    #           chunk. Sublane broadcast of the single pool row; Mosaic lowers
    #           this as broadcast-source vregs feeding the store stream (no
    #           materialized (bt, N) temp).
    out_ref[...] = jnp.broadcast_to(pool_ref[...], out_ref.shape)


def _round_up(x, m):
    return ((x + m - 1) // m) * m


def add_agnostic_prompts_forward(
    x,
    prompt_pool,
    *,
    target_tile_bytes=8 * 1024 * 1024,
    materialize=True,
):
    """Replicates prompt_pool across the batch dimension of x.

    Args:
      x: array whose leading dim is the batch size (contents unused).
      prompt_pool: (pool_size, d_model) parameter.
      target_tile_bytes: approximate size of each output VMEM tile (clamped
        to a VMEM budget internally).
      materialize: if False, return a fused broadcast view (preferred when
        the consumer can read it directly — avoids the HBM writeback
        entirely). If True, run the Pallas kernel and materialize the repeat
        (exact torch `.repeat` semantics).

    Returns:
      (batch_size, pool_size, d_model) array, dtype of prompt_pool.
    """
    batch_size = x.shape[0]
    pool_size, d_model = prompt_pool.shape

    if not materialize:
        # Zero-copy path: let XLA fuse the broadcast into the consumer.
        return jnp.broadcast_to(prompt_pool[None], (batch_size, pool_size, d_model))

    itemsize = jnp.dtype(prompt_pool.dtype).itemsize
    row_elems = pool_size * d_model
    row_bytes = row_elems * itemsize

    # Native sublane packing: 8 for 32-bit, 16 for 16-bit, 32 for 8-bit dtypes.
    pack = max(1, 4 // itemsize) * 8

    # Lane-dense layout: one prompt "row" per batch element, pool*d on lanes.
    # (If row_elems is not a multiple of 128 the stores become masked partial
    #  vst — a perf cliff only, still correct.)
    pool_flat = prompt_pool.reshape(1, row_elems)

    # ---- VMEM budget ---------------------------------------------------
    # Output is double-buffered (2 * tile).  The (1, row_elems) pool block is
    # sublane-padded to `pack` rows and double-buffered by the pipeliner, so
    # it costs ~2 * pack * row_bytes of VMEM.  Keep the total under ~28 MiB
    # so we fit v7x's 32 MiB scoped limit with headroom (v5e/v6e have more).
    vmem_budget = 28 * 1024 * 1024
    pool_vmem_bytes = 2 * pack * row_bytes
    tile_budget = max(row_bytes, (vmem_budget - pool_vmem_bytes) // 2)
    tile_bytes = min(target_tile_bytes, tile_budget)

    # ---- Batch tile (bt) -----------------------------------------------
    bt = max(1, tile_bytes // row_bytes)
    if batch_size > pack:
        # Keep >= 2 grid steps when the batch is splittable so both v7x
        # TensorCores issue output DMAs (neutral on single-TC chips).
        bt = min(bt, _round_up(pl.cdiv(batch_size, 2), pack))
    if bt < batch_size:
        # Pack-aligned partial blocks keep every vst unmasked for sub-32-bit
        # dtypes; the full-extent case (bt == batch_size) is always legal.
        bt = max(pack, (bt // pack) * pack)
    bt = min(bt, batch_size)
    if bt < batch_size and batch_size % bt != 0:
        # Prefer a bt that divides batch_size (avoids a masked edge block).
        for cand in range(bt, pack - 1, -pack):
            if batch_size % cand == 0:
                bt = cand
                break

    grid = (pl.cdiv(batch_size, bt),)

    # Pure HBM-bandwidth op: B rows written + one pool row read.
    cost = pl.CostEstimate(
        flops=0,
        transcendentals=0,
        bytes_accessed=batch_size * row_bytes + row_bytes,
    )

    out_flat = pl.pallas_call(
        _broadcast_prompt_kernel,
        out_shape=jax.ShapeDtypeStruct((batch_size, row_elems), prompt_pool.dtype),
        grid_spec=pltpu.PrefetchScalarGridSpec(
            num_scalar_prefetch=0,
            grid=grid,
            in_specs=[
                # Constant block index => pool fetched once, stays in VMEM.
                pl.BlockSpec((1, row_elems), lambda b: (0, 0)),
            ],
            out_specs=pl.BlockSpec((bt, row_elems), lambda b: (b, 0)),
        ),
        compiler_params=pltpu.CompilerParams(
            # Shards the batch grid across the two TensorCores on v7x;
            # near-neutral on single-TC v5e/v6e.
            dimension_semantics=("parallel",),
            vmem_limit_bytes=32 * 1024 * 1024,
        ),
        cost_estimate=cost,
    )(pool_flat)

    # Free layout plumbing back to the module's output shape.
    return out_flat.reshape(batch_size, pool_size, d_model)


def init_prompt_pool(key, pool_size, d_model, dtype=jnp.float32):
    # kaiming_normal_(mode='fan_in', nonlinearity='relu'):
    #   fan_in = d_model (second dim of a 2-D tensor), gain = sqrt(2)
    #   std = gain / sqrt(fan_in) = sqrt(2 / d_model)
    std = (2.0 / d_model) ** 0.5
    pool = std * jax.random.normal(key, (pool_size, d_model), dtype=jnp.float32)
    return pool.astype(dtype)


if __name__ == "__main__":
    key = jax.random.PRNGKey(0)
    k_pool, k_x = jax.random.split(key)

    batch = 2
    seq = 8
    d_model = 32
    pool_size = 64

    prompt_pool = init_prompt_pool(k_pool, pool_size, d_model)
    x = jax.random.normal(k_x, (batch, seq, d_model), dtype=jnp.float32)

    out = add_agnostic_prompts_forward(x, prompt_pool)
    out = jax.block_until_ready(out)

    # Reference check: torch .repeat(batch, 1, 1) == broadcast of the pool.
    ref = jnp.broadcast_to(prompt_pool[None], (batch, pool_size, d_model))
    assert out.shape == (batch, pool_size, d_model)
    assert out.dtype == prompt_pool.dtype
    assert bool(jnp.array_equal(out, ref))

    # Fused (non-materialized) fast path agrees too.
    out_view = add_agnostic_prompts_forward(x, prompt_pool, materialize=False)
    assert bool(jnp.array_equal(jax.block_until_ready(out_view), ref))

    print("KERNEL_OK")
</pallas_src>

<mosaic_0001>
module attributes {stable_mosaic.version = 11 : i64} {
  func.func @_broadcast_prompt_kernel(%arg0: i32, %arg1: memref<1x2048xf32, #tpu.memory_space<vmem>>, %arg2: memref<2x2048xf32, #tpu.memory_space<vmem>>) attributes {dimension_semantics = [#tpu.dimension_semantics<parallel>], iteration_bounds = array<i64: 1>, scalar_prefetch = 0 : i64, scratch_operands = 0 : i64, tpu.core_type = #tpu.core_type<tc>, window_params = [{pipeline_mode = #tpu.pipeline_mode<synchronous>, transform_indices = @transform_0, window_bounds = array<i64: 1, 2048>}, {transform_indices = @transform_1, window_bounds = array<i64: 2, 2048>}]} {
    %c0 = arith.constant 0 : index
    %c0_0 = arith.constant 0 : index
    %0 = vector.load %arg1[%c0, %c0_0] : memref<1x2048xf32, #tpu.memory_space<vmem>>, vector<1x2048xf32>
    %1 = vector.shape_cast %0 : vector<1x2048xf32> to vector<1x2048xf32>
    %2 = vector.broadcast %1 : vector<1x2048xf32> to vector<2x2048xf32>
    %c0_1 = arith.constant 0 : index
    %c0_2 = arith.constant 0 : index
    %3 = vector.load %arg2[%c0_1, %c0_2] : memref<2x2048xf32, #tpu.memory_space<vmem>>, vector<2x2048xf32>
    tpu.vector_store %arg2[%c0_1, %c0_2], %2 {strides = array<i32>} : memref<2x2048xf32, #tpu.memory_space<vmem>>, vector<2x2048xf32>,
    return
  }
  func.func @transform_0(%arg0: i32) -> (i32, i32) {
    %c0_i32 = arith.constant 0 : i32
    %c0_i32_0 = arith.constant 0 : i32
    %c0_i32_1 = arith.constant 0 : i32
    return %c0_i32, %c0_i32_0 : i32, i32
  }
  func.func @transform_1(%arg0: i32) -> (i32, i32) {
    %c0_i32 = arith.constant 0 : i32
    %c0_i32_0 = arith.constant 0 : i32
    return %arg0, %c0_i32 : i32, i32
  }
}

</mosaic_0001>

<llo_original>
// kernel: tpu_custom_call.1
$region0: #{tpu_custom_call.1}
  #allocation0 [shape = 'u32[]', space=smem, size = 0x4, offset = 0x4, fixed_abs, tag = 'smem constant byte address 0x4 - core index']
  #allocation1 [shape = 'u32[144,128]{1,0:T(1,128)}', space=vmem, size = 0x12000, scoped, tag = 'internal scratch']
  %s0 = inlined_call_operand.hbm [shape: f32[1,2048], index: 0, kind: input, shape index: {}]
  %s1 = inlined_call_operand.hbm [shape: f32[2,2048], index: 1, kind: output, shape index: {}]
  %s2 = sld [smem:[#allocation0]]
  $region18: #{tpu_custom_call.1} parent=0
    _
  %s4 = ssub.s32 1, %s2
  %s5 = scalar_select 0, %s4, %s2
  $region1: #{tpu_custom_call.1} parent=0
    #allocation2 [shape = 'u8[8192]{0}', space=vmem, size = 0x2000, scoped, tag = 'input window, operand 0, single buffered']
    #allocation3 [shape = 's32[1]{0}', space=sflag, size = 0x4, scoped, tag = 'scoped memory for tpu_custom_call.1']
    #allocation4 [shape = 's32[1]{0}', space=sflag, size = 0x4, scoped, tag = 'scoped memory for tpu_custom_call.1']
    #allocation5 [shape = 'u8[16384]{0}', space=vmem, size = 0x4000, scoped, tag = 'output window, operand 0, single buffered']
    %6 = vsyncpa [#allocation3], 0
    %7 = vsyncpa [#allocation4], 0
    // Predicated region
    $region2: #{tpu_custom_call.1} parent=1 // pred_check
      _
    $region3: #{tpu_custom_call.1} parent=1 // pred_check_branch
      %9 = sbr.rel (0) target = $region5
    $region4: #{tpu_custom_call.1} parent=1 // pred_region
      %s11 = ssub.s32 256, 256
      %12 = vsyncadd [#allocation3], %s11
      %s14 = sshll.u32 [#allocation2], 4
      %s15 = int_to_ptr.vmem [resolvable:$true] %s14
      %17 = dma.hbm_to_vmem [thread:$0]  %s0, 256, %s15, [#allocation3]
    $region5: #{tpu_custom_call.1} parent=1 // pred_fallthru
      _
    // Predicated region
    $region6: #{tpu_custom_call.1} parent=1 // pred_check
      _
    $region7: #{tpu_custom_call.1} parent=1 // pred_check_branch
      %19 = sbr.rel (0) target = $region9
    $region8: #{tpu_custom_call.1} parent=1 // pred_region
      %20 = dma.done [#allocation3], 256
    $region9: #{tpu_custom_call.1} parent=1 // pred_fallthru
      _
    %v21 = vld [vmem:[#allocation2] sm:$0xff]
    %v22 = vld [vmem:[#allocation2 + $0x8] sm:$0xff]
    %v25 = vlaneseq
    %v26 = vshrl.u32 %v25, 7
    %v27 = vsub.s32 0, %v26
    %v28 = vrot.slane %v21, %v27
    %v29 = vlaneseq
    %v30 = vshrl.u32 %v29, 7
    %v31 = vsub.s32 1, %v30
    %v32 = vrot.slane %v21, %v31
    %v33 = vlaneseq
    %v34 = vshrl.u32 %v33, 7
    %v35 = vsub.s32 2, %v34
    %v36 = vrot.slane %v21, %v35
    %v37 = vlaneseq
    %v38 = vshrl.u32 %v37, 7
    %v39 = vsub.s32 3, %v38
    %v40 = vrot.slane %v21, %v39
    %v41 = vlaneseq
    %v42 = vshrl.u32 %v41, 7
    %v43 = vsub.s32 4, %v42
    %v44 = vrot.slane %v21, %v43
    %v45 = vlaneseq
    %v46 = vshrl.u32 %v45, 7
    %v47 = vsub.s32 5, %v46
    %v48 = vrot.slane %v21, %v47
    %v49 = vlaneseq
    %v50 = vshrl.u32 %v49, 7
    %v51 = vsub.s32 6, %v50
    %v52 = vrot.slane %v21, %v51
    %v53 = vlaneseq
    %v54 = vshrl.u32 %v53, 7
    %v55 = vsub.s32 7, %v54
    %v56 = vrot.slane %v21, %v55
    %v57 = vlaneseq
    %v58 = vshrl.u32 %v57, 7
    %v59 = vsub.s32 0, %v58
    %v60 = vrot.slane %v22, %v59
    %v61 = vlaneseq
    %v62 = vshrl.u32 %v61, 7
    %v63 = vsub.s32 1, %v62
    %v64 = vrot.slane %v22, %v63
    %v65 = vlaneseq
    %v66 = vshrl.u32 %v65, 7
    %v67 = vsub.s32 2, %v66
    %v68 = vrot.slane %v22, %v67
    %v69 = vlaneseq
    %v70 = vshrl.u32 %v69, 7
    %v71 = vsub.s32 3, %v70
    %v72 = vrot.slane %v22, %v71
    %v73 = vlaneseq
    %v74 = vshrl.u32 %v73, 7
    %v75 = vsub.s32 4, %v74
    %v76 = vrot.slane %v22, %v75
    %v77 = vlaneseq
    %v78 = vshrl.u32 %v77, 7
    %v79 = vsub.s32 5, %v78
    %v80 = vrot.slane %v22, %v79
    %v81 = vlaneseq
    %v82 = vshrl.u32 %v81, 7
    %v83 = vsub.s32 6, %v82
    %v84 = vrot.slane %v22, %v83
    %v85 = vlaneseq
    %v86 = vshrl.u32 %v85, 7
    %v87 = vsub.s32 7, %v86
    %v88 = vrot.slane %v22, %v87
    %v89 = vcombine.low %v28, %v32
    %v90 = vcombine.low %v36, %v40
    %v92 = vunpack.c.l.s4 1983009808
    %v93 = vunpack.c.0.s8 %v92
    %v94 = vlaneseq
    %v95 = vshrl.u32 %v94, 7
    %v96 = vsub.s32 %v93, %v95
    %v97 = vrot.slane %v89, %v96
    %v99 = vunpack.c.l.s4 1983009808
    %v100 = vunpack.c.0.s8 %v99
    %v101 = vlaneseq
    %v102 = vshrl.u32 %v101, 7
    %v103 = vsub.s32 %v100, %v102
    %v104 = vrot.slane %v90, %v103
    %v105 = vcombine.low %v97, %v104
    %v106 = vcombine.low %v44, %v48
    %v107 = vcombine.low %v52, %v56
    %v109 = vunpack.c.l.s4 1983009808
    %v110 = vunpack.c.0.s8 %v109
    %v111 = vlaneseq
    %v112 = vshrl.u32 %v111, 7
    %v113 = vsub.s32 %v110, %v112
    %v114 = vrot.slane %v106, %v113
    %v116 = vunpack.c.l.s4 1983009808
    %v117 = vunpack.c.0.s8 %v116
    %v118 = vlaneseq
    %v119 = vshrl.u32 %v118, 7
    %v120 = vsub.s32 %v117, %v119
    %v121 = vrot.slane %v107, %v120
    %v122 = vcombine.low %v114, %v121
    %v123 = vcombine.low %v60, %v64
    %v124 = vcombine.low %v68, %v72
    %v126 = vunpack.c.l.s4 1983009808
    %v127 = vunpack.c.0.s8 %v126
    %v128 = vlaneseq
    %v129 = vshrl.u32 %v128, 7
    %v130 = vsub.s32 %v127, %v129
    %v131 = vrot.slane %v123, %v130
    %v133 = vunpack.c.l.s4 1983009808
    %v134 = vunpack.c.0.s8 %v133
    %v135 = vlaneseq
    %v136 = vshrl.u32 %v135, 7
    %v137 = vsub.s32 %v134, %v136
    %v138 = vrot.slane %v124, %v137
    %v139 = vcombine.low %v131, %v138
    %v140 = vcombine.low %v76, %v80
    %v141 = vcombine.low %v84, %v88
    %v143 = vunpack.c.l.s4 1983009808
    %v144 = vunpack.c.0.s8 %v143
    %v145 = vlaneseq
    %v146 = vshrl.u32 %v145, 7
    %v147 = vsub.s32 %v144, %v146
    %v148 = vrot.slane %v140, %v147
    %v150 = vunpack.c.l.s4 1983009808
    %v151 = vunpack.c.0.s8 %v150
    %v152 = vlaneseq
    %v153 = vshrl.u32 %v152, 7
    %v154 = vsub.s32 %v151, %v153
    %v155 = vrot.slane %v141, %v154
    %v156 = vcombine.low %v148, %v155
    %161 = vst [vmem:[#allocation5] sm:$0xff] %v105
    %162 = vst [vmem:[#allocation5 + $0x8] sm:$0xff] %v122
    %163 = vst [vmem:[#allocation5 + $0x10] sm:$0xff] %v139
    %164 = vst [vmem:[#allocation5 + $0x18] sm:$0xff] %v156
    // Predicated region
    $region10: #{tpu_custom_call.1} parent=1 // pred_check
      _
    $region11: #{tpu_custom_call.1} parent=1 // pred_check_branch
      %166 = sbr.rel (0) target = $region13
    $region12: #{tpu_custom_call.1} parent=1 // pred_region
      %s168 = ssub.s32 512, 512
      %169 = vsyncadd [#allocation4], %s168
      %s171 = sshll.u32 [#allocation5], 4
      %s172 = int_to_ptr.vmem [resolvable:$true] %s171
      %174 = dma.vmem_to_hbm [thread:$0]  %s172, 512, %s1, [#allocation4]
    $region13: #{tpu_custom_call.1} parent=1 // pred_fallthru
      _
    // Predicated region
    $region14: #{tpu_custom_call.1} parent=1 // pred_check
      _
    $region15: #{tpu_custom_call.1} parent=1 // pred_check_branch
      %176 = sbr.rel (0) target = $region17
    $region16: #{tpu_custom_call.1} parent=1 // pred_region
      %177 = dma.done [#allocation4], 512
    $region17: #{tpu_custom_call.1} parent=1 // pred_fallthru
      _
    %178 = vsyncpa [#allocation3], 1
    %179 = vsyncpa [#allocation4], 1

</llo_original>
